<compile_context>
chip_gen: v7x
topology: tpu7x:2x2x1
jax: 0.10.0
libtpu: 0.0.40
codegen_flags: <defaults>
</compile_context>

<pallas_src>
import math

import jax
import jax.numpy as jnp
from jax import lax
from jax.experimental import pallas as pl
from jax.experimental.pallas import tpu as pltpu


# ---------------------------------------------------------------------------
# Kernels
# ---------------------------------------------------------------------------
def _mm_bias_kernel_direct(x_ref, w_ref, b_ref, o_ref):
    """x:(tm,tk) @ w:(tn,tk)^T accumulated directly into f32 o:(tm,tn)."""
    k = pl.program_id(2)

    @pl.when(k == 0)
    def _():
        o_ref[...] = jnp.zeros_like(o_ref)

    o_ref[...] += lax.dot_general(
        x_ref[...],
        w_ref[...],
        dimension_numbers=(((1,), (1,)), ((), ())),  # contract K with K
        preferred_element_type=jnp.float32,
    )

    @pl.when(k == pl.num_programs(2) - 1)
    def _():
        o_ref[...] = o_ref[...] + b_ref[...]  # (tm,tn) + (1,tn) broadcast


def _mm_bias_kernel_acc(x_ref, w_ref, b_ref, o_ref, acc_ref):
    """Same as above but with an f32 scratch accumulator (non-f32 outputs)."""
    k = pl.program_id(2)

    @pl.when(k == 0)
    def _():
        acc_ref[...] = jnp.zeros_like(acc_ref)

    acc_ref[...] += lax.dot_general(
        x_ref[...],
        w_ref[...],
        dimension_numbers=(((1,), (1,)), ((), ())),
        preferred_element_type=jnp.float32,
    )

    @pl.when(k == pl.num_programs(2) - 1)
    def _():
        o_ref[...] = (acc_ref[...] + b_ref[...]).astype(o_ref.dtype)


# ---------------------------------------------------------------------------
# Tiling / padding helpers
# ---------------------------------------------------------------------------
def _round_up(x, m):
    return (x + m - 1) // m * m


def _choose_tiles(M, N, K, itemsize):
    """Return padded dims (Mp, Np, Kp) and tile sizes (tm, tn, tk)."""
    Mp = _round_up(M, 8)
    Np = _round_up(N, 128)
    Kp = _round_up(K, 128)

    # Whole (padded) problem comfortably resident in VMEM -> single block.
    total_bytes = (Mp * Kp + Kp * Np + Mp * Np) * itemsize
    if total_bytes <= (4 << 20):
        return Mp, Np, Kp, Mp, Np, Kp

    tm = min(256, Mp)
    tn = min(256, Np)
    tk = min(512, Kp)
    Mp = _round_up(Mp, tm)
    Np = _round_up(Np, tn)
    Kp = _round_up(Kp, tk)
    return Mp, Np, Kp, tm, tn, tk


# ---------------------------------------------------------------------------
# Public wrapper: y = x @ weight.T (+ bias)
# ---------------------------------------------------------------------------
def column_parallel_linear(x, weight, bias=None, *, compute_dtype=None):
    """ColumnParallelLinear.forward.

    x:      (..., in_features)
    weight: (out_features, in_features)   -- kept in native (N, K) layout
    bias:   (out_features,) or None
    compute_dtype: optional lower-precision dtype (e.g. jnp.bfloat16) for the
        MXU operands; accumulation stays f32. Default keeps the input dtype.
    """
    N, K = weight.shape
    lead = x.shape[:-1]
    assert x.shape[-1] == K, "in_features mismatch"
    M = int(math.prod(lead)) if lead else 1

    out_dtype = x.dtype
    in_dtype = jnp.dtype(compute_dtype) if compute_dtype is not None else x.dtype

    x2d = x.reshape(M, K).astype(in_dtype)
    w = weight.astype(in_dtype)  # stays (N, K): no transpose, no extra HBM copy
    b = bias if bias is not None else jnp.zeros((N,), jnp.float32)
    b = b.astype(jnp.float32)

    itemsize = jnp.dtype(in_dtype).itemsize
    Mp, Np, Kp, tm, tn, tk = _choose_tiles(M, N, K, itemsize)

    # Zero-pad ragged shapes to tile-aligned extents (correct for matmul).
    if (Mp, Kp) != (M, K):
        x2d = jnp.pad(x2d, ((0, Mp - M), (0, Kp - K)))
    if (Np, Kp) != (N, K):
        w = jnp.pad(w, ((0, Np - N), (0, Kp - K)))
    if Np != N:
        b = jnp.pad(b, (0, Np - N))
    b2d = b.reshape(1, Np)

    direct = out_dtype == jnp.float32
    kernel = _mm_bias_kernel_direct if direct else _mm_bias_kernel_acc
    scratch = [] if direct else [pltpu.VMEM((tm, tn), jnp.float32)]

    out_itemsize = jnp.dtype(out_dtype).itemsize
    vmem_need = (
        2 * (tm * tk + tn * tk) * itemsize  # double-buffered x & w tiles
        + 2 * tm * tn * out_itemsize        # double-buffered output tile
        + (0 if direct else tm * tn * 4)    # f32 accumulator scratch
        + 2 * tn * 4                        # bias tile
    )
    vmem_limit = int(min(max(2 * vmem_need, 32 << 20), 64 << 20))

    y2d = pl.pallas_call(
        kernel,
        out_shape=jax.ShapeDtypeStruct((Mp, Np), out_dtype),
        grid_spec=pltpu.PrefetchScalarGridSpec(
            num_scalar_prefetch=0,
            grid=(Mp // tm, Np // tn, Kp // tk),
            in_specs=[
                pl.BlockSpec((tm, tk), lambda i, j, k: (i, k)),   # x  (M, K)
                pl.BlockSpec((tn, tk), lambda i, j, k: (j, k)),   # w  (N, K)
                pl.BlockSpec((1, tn), lambda i, j, k: (0, j)),    # bias (1, N)
            ],
            out_specs=pl.BlockSpec((tm, tn), lambda i, j, k: (i, j)),
            scratch_shapes=scratch,
        ),
        compiler_params=pltpu.CompilerParams(
            dimension_semantics=("parallel", "parallel", "arbitrary"),
            vmem_limit_bytes=vmem_limit,
        ),
    )(x2d, w, b2d)

    if (Mp, Np) != (M, N):
        y2d = y2d[:M, :N]
    return y2d.reshape(*lead, N)


# TODO(synk): quantized weight path (element_size()==1 with per-block `scale`)
# from the original Linear is not implemented; only the fp path is covered.


if __name__ == "__main__":
    # Small shapes consistent with the module's forward:
    # x: (batch, seq, in_features) = (2, 8, 256); weight: (out, in) = (512, 256)
    batch, seq, in_features, out_features = 2, 8, 256, 512

    key = jax.random.PRNGKey(0)
    kx, kw, kb = jax.random.split(key, 3)
    x = jax.random.normal(kx, (batch, seq, in_features), dtype=jnp.float32)
    weight = (
        jax.random.normal(kw, (out_features, in_features), dtype=jnp.float32)
        * (1.0 / jnp.sqrt(in_features))
    )

    # 1) Default module config: bias=False.
    y = column_parallel_linear(x, weight, bias=None)
    y = jax.block_until_ready(y)
    y_ref = jnp.einsum("bsk,nk->bsn", x, weight)
    assert y.shape == (batch, seq, out_features)
    assert jnp.allclose(y, y_ref, atol=1e-4, rtol=1e-4)

    # 2) Fused-bias epilogue path.
    bias = jax.random.normal(kb, (out_features,), dtype=jnp.float32)
    yb = jax.block_until_ready(column_parallel_linear(x, weight, bias=bias))
    assert jnp.allclose(yb, y_ref + bias[None, None, :], atol=1e-4, rtol=1e-4)

    # 3) Ragged (non-128-aligned) shapes exercise the padding path.
    in2, out2, b2, s2 = 200, 300, 2, 5
    kx2, kw2 = jax.random.split(jax.random.PRNGKey(0))
    x2 = jax.random.normal(kx2, (b2, s2, in2), dtype=jnp.float32)
    w2 = jax.random.normal(kw2, (out2, in2), dtype=jnp.float32) * (1.0 / jnp.sqrt(in2))
    y2 = jax.block_until_ready(column_parallel_linear(x2, w2))
    y2_ref = jnp.einsum("bsk,nk->bsn", x2, w2)
    assert y2.shape == (b2, s2, out2)
    assert jnp.allclose(y2, y2_ref, atol=1e-4, rtol=1e-4)

    print("KERNEL_OK")
</pallas_src>

<mosaic_0001>
module attributes {stable_mosaic.version = 11 : i64} {
  func.func @_mm_bias_kernel_direct(%arg0: i32, %arg1: i32, %arg2: i32, %arg3: memref<16x256xf32, #tpu.memory_space<vmem>>, %arg4: memref<512x256xf32, #tpu.memory_space<vmem>>, %arg5: memref<1x512xf32, #tpu.memory_space<vmem>>, %arg6: memref<16x512xf32, #tpu.memory_space<vmem>>) attributes {dimension_semantics = [#tpu.dimension_semantics<parallel>, #tpu.dimension_semantics<parallel>, #tpu.dimension_semantics<arbitrary>], iteration_bounds = array<i64: 1, 1, 1>, scalar_prefetch = 0 : i64, scratch_operands = 0 : i64, tpu.core_type = #tpu.core_type<tc>, window_params = [{transform_indices = @transform_0, window_bounds = array<i64: 16, 256>}, {transform_indices = @transform_1, window_bounds = array<i64: 512, 256>}, {transform_indices = @transform_2, window_bounds = array<i64: 1, 512>}, {transform_indices = @transform_3, window_bounds = array<i64: 16, 512>}]} {
    %c0_i32 = arith.constant 0 : i32
    %0 = arith.cmpi eq, %arg2, %c0_i32 : i32
    %1 = arith.extui %0 : i1 to i32
    %c0_i32_0 = arith.constant 0 : i32
    %2 = arith.cmpi ne, %1, %c0_i32_0 : i32
    scf.if %2 {
      %cst_10 = arith.constant 0.000000e+00 : f32
      %12 = vector.broadcast %cst_10 : f32 to vector<16x512xf32>
      %c0_11 = arith.constant 0 : index
      %c0_12 = arith.constant 0 : index
      %13 = vector.load %arg6[%c0_11, %c0_12] : memref<16x512xf32, #tpu.memory_space<vmem>>, vector<16x512xf32>
      tpu.vector_store %arg6[%c0_11, %c0_12], %12 {strides = array<i32>} : memref<16x512xf32, #tpu.memory_space<vmem>>, vector<16x512xf32>,
    } else {
    }
    %c0 = arith.constant 0 : index
    %c0_1 = arith.constant 0 : index
    %3 = vector.load %arg6[%c0, %c0_1] : memref<16x512xf32, #tpu.memory_space<vmem>>, vector<16x512xf32>
    %c0_2 = arith.constant 0 : index
    %c0_3 = arith.constant 0 : index
    %4 = vector.load %arg3[%c0_2, %c0_3] : memref<16x256xf32, #tpu.memory_space<vmem>>, vector<16x256xf32>
    %c0_4 = arith.constant 0 : index
    %c0_5 = arith.constant 0 : index
    %5 = vector.load %arg4[%c0_4, %c0_5] : memref<512x256xf32, #tpu.memory_space<vmem>>, vector<512x256xf32>
    %cst = arith.constant dense<0.000000e+00> : vector<16x512xf32>
    %6 = tpu.matmul %4, %5, %cst {dimension_numbers = #tpu.dot_dimension_numbers<[1], [1], [0], [0], [0, 0, 1, 0], [], []>} : vector<16x256xf32>, vector<512x256xf32>, vector<16x512xf32> -> vector<16x512xf32>
    %7 = arith.addf %3, %6 : vector<16x512xf32>
    %c0_6 = arith.constant 0 : index
    %c0_7 = arith.constant 0 : index
    %8 = vector.load %arg6[%c0_6, %c0_7] : memref<16x512xf32, #tpu.memory_space<vmem>>, vector<16x512xf32>
    tpu.vector_store %arg6[%c0_6, %c0_7], %7 {strides = array<i32>} : memref<16x512xf32, #tpu.memory_space<vmem>>, vector<16x512xf32>,
    %c0_i32_8 = arith.constant 0 : i32
    %9 = arith.cmpi eq, %arg2, %c0_i32_8 : i32
    %10 = arith.extui %9 : i1 to i32
    %c0_i32_9 = arith.constant 0 : i32
    %11 = arith.cmpi ne, %10, %c0_i32_9 : i32
    scf.if %11 {
      %c0_10 = arith.constant 0 : index
      %c0_11 = arith.constant 0 : index
      %12 = vector.load %arg6[%c0_10, %c0_11] : memref<16x512xf32, #tpu.memory_space<vmem>>, vector<16x512xf32>
      %c0_12 = arith.constant 0 : index
      %c0_13 = arith.constant 0 : index
      %13 = vector.load %arg5[%c0_12, %c0_13] : memref<1x512xf32, #tpu.memory_space<vmem>>, vector<1x512xf32>
      %14 = vector.broadcast %13 : vector<1x512xf32> to vector<16x512xf32>
      %15 = arith.addf %12, %14 : vector<16x512xf32>
      %c0_14 = arith.constant 0 : index
      %c0_15 = arith.constant 0 : index
      %16 = vector.load %arg6[%c0_14, %c0_15] : memref<16x512xf32, #tpu.memory_space<vmem>>, vector<16x512xf32>
      tpu.vector_store %arg6[%c0_14, %c0_15], %15 {strides = array<i32>} : memref<16x512xf32, #tpu.memory_space<vmem>>, vector<16x512xf32>,
    } else {
    }
    return
  }
  func.func @transform_0(%arg0: i32, %arg1: i32, %arg2: i32) -> (i32, i32) {
    %c0_i32 = arith.constant 0 : i32
    return %arg0, %arg2 : i32, i32
  }
  func.func @transform_1(%arg0: i32, %arg1: i32, %arg2: i32) -> (i32, i32) {
    %c0_i32 = arith.constant 0 : i32
    return %arg1, %arg2 : i32, i32
  }
  func.func @transform_2(%arg0: i32, %arg1: i32, %arg2: i32) -> (i32, i32) {
    %c0_i32 = arith.constant 0 : i32
    %c0_i32_0 = arith.constant 0 : i32
    return %c0_i32, %arg1 : i32, i32
  }
  func.func @transform_3(%arg0: i32, %arg1: i32, %arg2: i32) -> (i32, i32) {
    %c0_i32 = arith.constant 0 : i32
    return %arg0, %arg1 : i32, i32
  }
}

</mosaic_0001>

<llo_original>
// kernel: tpu_custom_call.1
$region0: #{tpu_custom_call.1}
  #allocation0 [shape = 'u32[]', space=smem, size = 0x4, offset = 0x4, fixed_abs, tag = 'smem constant byte address 0x4 - core index']
  #allocation1 [shape = 'u32[144,128]{1,0:T(1,128)}', space=vmem, size = 0x12000, scoped, tag = 'internal scratch']
  %s0 = inlined_call_operand.hbm [shape: f32[16,256], index: 0, kind: input, shape index: {}]
  %s1 = inlined_call_operand.hbm [shape: f32[512,256], index: 1, kind: input, shape index: {}]
  %s2 = inlined_call_operand.vmem [shape: f32[1,512], index: 2, kind: input, shape index: {}]
  %s3 = inlined_call_operand.hbm [shape: f32[16,512], index: 3, kind: output, shape index: {}]
  %s4 = sld [smem:[#allocation0]]
  $region38: #{tpu_custom_call.1} parent=0
    _
  %s6 = ssub.s32 1, %s4
  %s7 = scalar_select 0, %s6, %s4
  $region1: #{tpu_custom_call.1} parent=0
    #allocation2 [shape = 'u8[16384]{0}', space=vmem, size = 0x4000, scoped, tag = 'input window, operand 0, single buffered']
    #allocation3 [shape = 's32[1]{0}', space=sflag, size = 0x4, scoped, tag = 'scoped memory for tpu_custom_call.1']
    #allocation4 [shape = 's32[1]{0}', space=sflag, size = 0x4, scoped, tag = 'scoped memory for tpu_custom_call.1']
    #allocation5 [shape = 'u8[524288]{0}', space=vmem, size = 0x80000, scoped, tag = 'input window, operand 1, single buffered']
    #allocation6 [shape = 's32[1]{0}', space=sflag, size = 0x4, scoped, tag = 'scoped memory for tpu_custom_call.1']
    #allocation7 [shape = 'u8[32768]{0}', space=vmem, size = 0x8000, scoped, tag = 'output window, operand 0, single buffered']
    %8 = vsyncpa [#allocation3], 0
    %9 = vsyncpa [#allocation6], 0
    %10 = vsyncpa [#allocation4], 0
    // Predicated region
    $region2: #{tpu_custom_call.1} parent=1 // pred_check
      _
    $region3: #{tpu_custom_call.1} parent=1 // pred_check_branch
      %12 = sbr.rel (0) target = $region5
    $region4: #{tpu_custom_call.1} parent=1 // pred_region
      %s14 = ssub.s32 512, 512
      %15 = vsyncadd [#allocation3], %s14
      %s16 = sshll.u32 [#allocation2], 4
      %s17 = int_to_ptr.vmem [resolvable:$true] %s16
      %22 = dma.hbm_to_vmem [thread:$0]  %s0, 512, %s17, [#allocation3], 256, 256, 16
    $region5: #{tpu_custom_call.1} parent=1 // pred_fallthru
      _
    // Predicated region
    $region6: #{tpu_custom_call.1} parent=1 // pred_check
      _
    $region7: #{tpu_custom_call.1} parent=1 // pred_check_branch
      %24 = sbr.rel (0) target = $region9
    $region8: #{tpu_custom_call.1} parent=1 // pred_region
      %s26 = ssub.s32 16384, 16384
      %27 = vsyncadd [#allocation6], %s26
      %s28 = sshll.u32 [#allocation5], 4
      %s29 = int_to_ptr.vmem [resolvable:$true] %s28
      %34 = dma.hbm_to_vmem [thread:$0]  %s1, 16384, %s29, [#allocation6], 256, 256, 16
    $region9: #{tpu_custom_call.1} parent=1 // pred_fallthru
      _
    // Predicated region
    $region10: #{tpu_custom_call.1} parent=1 // pred_check
      _
    $region11: #{tpu_custom_call.1} parent=1 // pred_check_branch
      %36 = sbr.rel (0) target = $region13
    $region12: #{tpu_custom_call.1} parent=1 // pred_region
      _
    $region13: #{tpu_custom_call.1} parent=1 // pred_fallthru
      _
    // Predicated region
    $region14: #{tpu_custom_call.1} parent=1 // pred_check
      _
    $region15: #{tpu_custom_call.1} parent=1 // pred_check_branch
      %38 = sbr.rel (0) target = $region17
    $region16: #{tpu_custom_call.1} parent=1 // pred_region
      %39 = dma.done [#allocation3], 512
    $region17: #{tpu_custom_call.1} parent=1 // pred_fallthru
      _
    // Predicated region
    $region18: #{tpu_custom_call.1} parent=1 // pred_check
      _
    $region19: #{tpu_custom_call.1} parent=1 // pred_check_branch
      %41 = sbr.rel (0) target = $region21
    $region20: #{tpu_custom_call.1} parent=1 // pred_region
      %42 = dma.done [#allocation6], 16384
    $region21: #{tpu_custom_call.1} parent=1 // pred_fallthru
      _
    %p43 = scmp.eq.s32.totalorder 0, 0
    // Predicated region
    $region22: #{tpu_custom_call.1} parent=1 // pred_check
      %p44 = pneg %p43
    $region23: #{tpu_custom_call.1} parent=1 // pred_check_branch
      %46 = sbr.rel (%p44) target = $region25
    $region24: #{tpu_custom_call.1} parent=1 // pred_region
      %47 = vst [vmem:[#allocation7] sm:$0xff] 0.0
      %48 = vst [vmem:[#allocation7 + $0x8] sm:$0xff] 0.0
      %49 = vst [vmem:[#allocation7 + $0x10] sm:$0xff] 0.0
      %50 = vst [vmem:[#allocation7 + $0x18] sm:$0xff] 0.0
      %51 = vst [vmem:[#allocation7 + $0x20] sm:$0xff] 0.0
      %52 = vst [vmem:[#allocation7 + $0x28] sm:$0xff] 0.0
      %53 = vst [vmem:[#allocation7 + $0x30] sm:$0xff] 0.0
      %54 = vst [vmem:[#allocation7 + $0x38] sm:$0xff] 0.0
    $region25: #{tpu_custom_call.1} parent=1 // pred_fallthru
      _
    %v55 = vld [vmem:[#allocation7] sm:$0xff]
    %v56 = vld [vmem:[#allocation7 + $0x8] sm:$0xff]
    %v57 = vld [vmem:[#allocation7 + $0x10] sm:$0xff]
    %v58 = vld [vmem:[#allocation7 + $0x18] sm:$0xff]
    %v59 = vld [vmem:[#allocation7 + $0x20] sm:$0xff]
    %v60 = vld [vmem:[#allocation7 + $0x28] sm:$0xff]
    %v61 = vld [vmem:[#allocation7 + $0x30] sm:$0xff]
    %v62 = vld [vmem:[#allocation7 + $0x38] sm:$0xff]
    %v63 = vld [vmem:[#allocation2] sm:$0xff]
    %v64 = vld [vmem:[#allocation2 + $0x8] sm:$0xff]
    %v65 = vld [vmem:[#allocation2 + $0x10] sm:$0xff]
    %v66 = vld [vmem:[#allocation2 + $0x18] sm:$0xff]
    %v67 = vld [vmem:[#allocation5] sm:$0xff]
    %v68 = vld [vmem:[#allocation5 + $0x8] sm:$0xff]
    %v69 = vld [vmem:[#allocation5 + $0x10] sm:$0xff]
    %v70 = vld [vmem:[#allocation5 + $0x18] sm:$0xff]
    %v71 = vld [vmem:[#allocation5 + $0x20] sm:$0xff]
    %v72 = vld [vmem:[#allocation5 + $0x28] sm:$0xff]
    %v73 = vld [vmem:[#allocation5 + $0x30] sm:$0xff]
    %v74 = vld [vmem:[#allocation5 + $0x38] sm:$0xff]
    %v75 = vld [vmem:[#allocation5 + $0x40] sm:$0xff]
    %v76 = vld [vmem:[#allocation5 + $0x48] sm:$0xff]
    %v77 = vld [vmem:[#allocation5 + $0x50] sm:$0xff]
    %v78 = vld [vmem:[#allocation5 + $0x58] sm:$0xff]
    %v79 = vld [vmem:[#allocation5 + $0x60] sm:$0xff]
    %v80 = vld [vmem:[#allocation5 + $0x68] sm:$0xff]
    %v81 = vld [vmem:[#allocation5 + $0x70] sm:$0xff]
    %v82 = vld [vmem:[#allocation5 + $0x78] sm:$0xff]
    %v83 = vld [vmem:[#allocation5 + $0x80] sm:$0xff]
    %v84 = vld [vmem:[#allocation5 + $0x88] sm:$0xff]
    %v85 = vld [vmem:[#allocation5 + $0x90] sm:$0xff]
    %v86 = vld [vmem:[#allocation5 + $0x98] sm:$0xff]
    %v87 = vld [vmem:[#allocation5 + $0xa0] sm:$0xff]
    %v88 = vld [vmem:[#allocation5 + $0xa8] sm:$0xff]
    %v89 = vld [vmem:[#allocation5 + $0xb0] sm:$0xff]
    %v90 = vld [vmem:[#allocation5 + $0xb8] sm:$0xff]
    %v91 = vld [vmem:[#allocation5 + $0xc0] sm:$0xff]
    %v92 = vld [vmem:[#allocation5 + $0xc8] sm:$0xff]
    %v93 = vld [vmem:[#allocation5 + $0xd0] sm:$0xff]
    %v94 = vld [vmem:[#allocation5 + $0xd8] sm:$0xff]
    %v95 = vld [vmem:[#allocation5 + $0xe0] sm:$0xff]
    %v96 = vld [vmem:[#allocation5 + $0xe8] sm:$0xff]
    %v97 = vld [vmem:[#allocation5 + $0xf0] sm:$0xff]
    %v98 = vld [vmem:[#allocation5 + $0xf8] sm:$0xff]
    %v99 = vld [vmem:[#allocation5 + $0x100] sm:$0xff]
    %v100 = vld [vmem:[#allocation5 + $0x108] sm:$0xff]
    %v101 = vld [vmem:[#allocation5 + $0x110] sm:$0xff]
    %v102 = vld [vmem:[#allocation5 + $0x118] sm:$0xff]
    %v103 = vld [vmem:[#allocation5 + $0x120] sm:$0xff]
    %v104 = vld [vmem:[#allocation5 + $0x128] sm:$0xff]
    %v105 = vld [vmem:[#allocation5 + $0x130] sm:$0xff]
    %v106 = vld [vmem:[#allocation5 + $0x138] sm:$0xff]
    %v107 = vld [vmem:[#allocation5 + $0x140] sm:$0xff]
    %v108 = vld [vmem:[#allocation5 + $0x148] sm:$0xff]
    %v109 = vld [vmem:[#allocation5 + $0x150] sm:$0xff]
    %v110 = vld [vmem:[#allocation5 + $0x158] sm:$0xff]
    %v111 = vld [vmem:[#allocation5 + $0x160] sm:$0xff]
    %v112 = vld [vmem:[#allocation5 + $0x168] sm:$0xff]
    %v113 = vld [vmem:[#allocation5 + $0x170] sm:$0xff]
    %v114 = vld [vmem:[#allocation5 + $0x178] sm:$0xff]
    %v115 = vld [vmem:[#allocation5 + $0x180] sm:$0xff]
    %v116 = vld [vmem:[#allocation5 + $0x188] sm:$0xff]
    %v117 = vld [vmem:[#allocation5 + $0x190] sm:$0xff]
    %v118 = vld [vmem:[#allocation5 + $0x198] sm:$0xff]
    %v119 = vld [vmem:[#allocation5 + $0x1a0] sm:$0xff]
    %v120 = vld [vmem:[#allocation5 + $0x1a8] sm:$0xff]
    %v121 = vld [vmem:[#allocation5 + $0x1b0] sm:$0xff]
    %v122 = vld [vmem:[#allocation5 + $0x1b8] sm:$0xff]
    %v123 = vld [vmem:[#allocation5 + $0x1c0] sm:$0xff]
    %v124 = vld [vmem:[#allocation5 + $0x1c8] sm:$0xff]
    %v125 = vld [vmem:[#allocation5 + $0x1d0] sm:$0xff]
    %v126 = vld [vmem:[#allocation5 + $0x1d8] sm:$0xff]
    %v127 = vld [vmem:[#allocation5 + $0x1e0] sm:$0xff]
    %v128 = vld [vmem:[#allocation5 + $0x1e8] sm:$0xff]
    %v129 = vld [vmem:[#allocation5 + $0x1f0] sm:$0xff]
    %v130 = vld [vmem:[#allocation5 + $0x1f8] sm:$0xff]
    %v131 = vld [vmem:[#allocation5 + $0x200] sm:$0xff]
    %v132 = vld [vmem:[#allocation5 + $0x208] sm:$0xff]
    %v133 = vld [vmem:[#allocation5 + $0x210] sm:$0xff]
    %v134 = vld [vmem:[#allocation5 + $0x218] sm:$0xff]
    %v135 = vld [vmem:[#allocation5 + $0x220] sm:$0xff]
    %v136 = vld [vmem:[#allocation5 + $0x228] sm:$0xff]
    %v137 = vld [vmem:[#allocation5 + $0x230] sm:$0xff]
    %v138 = vld [vmem:[#allocation5 + $0x238] sm:$0xff]
    %v139 = vld [vmem:[#allocation5 + $0x240] sm:$0xff]
    %v140 = vld [vmem:[#allocation5 + $0x248] sm:$0xff]
    %v141 = vld [vmem:[#allocation5 + $0x250] sm:$0xff]
    %v142 = vld [vmem:[#allocation5 + $0x258] sm:$0xff]
    %v143 = vld [vmem:[#allocation5 + $0x260] sm:$0xff]
    %v144 = vld [vmem:[#allocation5 + $0x268] sm:$0xff]
    %v145 = vld [vmem:[#allocation5 + $0x270] sm:$0xff]
    %v146 = vld [vmem:[#allocation5 + $0x278] sm:$0xff]
    %v147 = vld [vmem:[#allocation5 + $0x280] sm:$0xff]
    %v148 = vld [vmem:[#allocation5 + $0x288] sm:$0xff]
    %v149 = vld [vmem:[#allocation5 + $0x290] sm:$0xff]
    %v150 = vld [vmem:[#allocation5 + $0x298] sm:$0xff]
    %v151 = vld [vmem:[#allocation5 + $0x2a0] sm:$0xff]
    %v152 = vld [vmem:[#allocation5 + $0x2a8] sm:$0xff]
    %v153 = vld [vmem:[#allocation5 + $0x2b0] sm:$0xff]
    %v154 = vld [vmem:[#allocation5 + $0x2b8] sm:$0xff]
    %v155 = vld [vmem:[#allocation5 + $0x2c0] sm:$0xff]
    %v156 = vld [vmem:[#allocation5 + $0x2c8] sm:$0xff]
    %v157 = vld [vmem:[#allocation5 + $0x2d0] sm:$0xff]
    %v158 = vld [vmem:[#allocation5 + $0x2d8] sm:$0xff]
    %v159 = vld [vmem:[#allocation5 + $0x2e0] sm:$0xff]
    %v160 = vld [vmem:[#allocation5 + $0x2e8] sm:$0xff]
    %v161 = vld [vmem:[#allocation5 + $0x2f0] sm:$0xff]
    %v162 = vld [vmem:[#allocation5 + $0x2f8] sm:$0xff]
    %v163 = vld [vmem:[#allocation5 + $0x300] sm:$0xff]
    %v164 = vld [vmem:[#allocation5 + $0x308] sm:$0xff]
    %v165 = vld [vmem:[#allocation5 + $0x310] sm:$0xff]
    %v166 = vld [vmem:[#allocation5 + $0x318] sm:$0xff]
    %v167 = vld [vmem:[#allocation5 + $0x320] sm:$0xff]
    %v168 = vld [vmem:[#allocation5 + $0x328] sm:$0xff]
    %v169 = vld [vmem:[#allocation5 + $0x330] sm:$0xff]
    %v170 = vld [vmem:[#allocation5 + $0x338] sm:$0xff]
    %v171 = vld [vmem:[#allocation5 + $0x340] sm:$0xff]
    %v172 = vld [vmem:[#allocation5 + $0x348] sm:$0xff]
    %v173 = vld [vmem:[#allocation5 + $0x350] sm:$0xff]
    %v174 = vld [vmem:[#allocation5 + $0x358] sm:$0xff]
    %v175 = vld [vmem:[#allocation5 + $0x360] sm:$0xff]
    %v176 = vld [vmem:[#allocation5 + $0x368] sm:$0xff]
    %v177 = vld [vmem:[#allocation5 + $0x370] sm:$0xff]
    %v178 = vld [vmem:[#allocation5 + $0x378] sm:$0xff]
    %v179 = vld [vmem:[#allocation5 + $0x380] sm:$0xff]
    %v180 = vld [vmem:[#allocation5 + $0x388] sm:$0xff]
    %v181 = vld [vmem:[#allocation5 + $0x390] sm:$0xff]
    %v182 = vld [vmem:[#allocation5 + $0x398] sm:$0xff]
    %v183 = vld [vmem:[#allocation5 + $0x3a0] sm:$0xff]
    %v184 = vld [vmem:[#allocation5 + $0x3a8] sm:$0xff]
    %v185 = vld [vmem:[#allocation5 + $0x3b0] sm:$0xff]
    %v186 = vld [vmem:[#allocation5 + $0x3b8] sm:$0xff]
    %v187 = vld [vmem:[#allocation5 + $0x3c0] sm:$0xff]
    %v188 = vld [vmem:[#allocation5 + $0x3c8] sm:$0xff]
    %v189 = vld [vmem:[#allocation5 + $0x3d0] sm:$0xff]
    %v190 = vld [vmem:[#allocation5 + $0x3d8] sm:$0xff]
    %v191 = vld [vmem:[#allocation5 + $0x3e0] sm:$0xff]
    %v192 = vld [vmem:[#allocation5 + $0x3e8] sm:$0xff]
    %v193 = vld [vmem:[#allocation5 + $0x3f0] sm:$0xff]
    %v194 = vld [vmem:[#allocation5 + $0x3f8] sm:$0xff]
    %195 = vmatprep.subr.mxu0 %v68
    %196 = vmatpush1.xpose.msra.mxu0 %v67
    %197 = vmatprep.subr.mxu0 %v70
    %198 = vmatpush1.xpose.msra.mxu0 %v69
    %199 = vmatprep.subr.mxu0 %v72
    %200 = vmatpush1.xpose.msra.mxu0 %v71
    %201 = vmatprep.subr.mxu0 %v74
    %202 = vmatpush1.xpose.msra.mxu0 %v73
    %203 = vmatprep.subr.mxu0 %v76
    %204 = vmatpush1.xpose.msra.mxu0 %v75
    %205 = vmatprep.subr.mxu0 %v78
    %206 = vmatpush1.xpose.msra.mxu0 %v77
    %207 = vmatprep.subr.mxu0 %v80
    %208 = vmatpush1.xpose.msra.mxu0 %v79
    %209 = vmatprep.subr.mxu0 %v82
    %210 = vmatpush1.xpose.msra.mxu0 %v81
    %211 = vmatprep.subr.mxu0 %v84
    %212 = vmatpush1.xpose.msra.mxu0 %v83
    %213 = vmatprep.subr.mxu0 %v86
    %214 = vmatpush1.xpose.msra.mxu0 %v85
    %215 = vmatprep.subr.mxu0 %v88
    %216 = vmatpush1.xpose.msra.mxu0 %v87
    %217 = vmatprep.subr.mxu0 %v90
    %218 = vmatpush1.xpose.msra.mxu0 %v89
    %219 = vmatprep.subr.mxu0 %v92
    %220 = vmatpush1.xpose.msra.mxu0 %v91
    %221 = vmatprep.subr.mxu0 %v94
    %222 = vmatpush1.xpose.msra.mxu0 %v93
    %223 = vmatprep.subr.mxu0 %v96
    %224 = vmatpush1.xpose.msra.mxu0 %v95
    %225 = vmatprep.subr.mxu0 %v98
    %226 = vmatpush1.xpose.msra.mxu0 %v97
    %227 = vmatprep.subr.mxu0 %v100
    %228 = vmatpush1.xpose.msra.mxu0 %v99
    %229 = vmatprep.subr.mxu0 %v102
    %230 = vmatpush1.xpose.msra.mxu0 %v101
    %231 = vmatprep.subr.mxu0 %v104
    %232 = vmatpush1.xpose.msra.mxu0 %v103
    %233 = vmatprep.subr.mxu0 %v106
    %234 = vmatpush1.xpose.msra.mxu0 %v105
    %235 = vmatprep.subr.mxu0 %v108
    %236 = vmatpush1.xpose.msra.mxu0 %v107
    %237 = vmatprep.subr.mxu0 %v110
    %238 = vmatpush1.xpose.msra.mxu0 %v109
    %239 = vmatprep.subr.mxu0 %v112
    %240 = vmatpush1.xpose.msra.mxu0 %v111
    %241 = vmatprep.subr.mxu0 %v114
    %242 = vmatpush1.xpose.msra.mxu0 %v113
    %243 = vmatprep.subr.mxu0 %v116
    %244 = vmatpush1.xpose.msra.mxu0 %v115
    %245 = vmatprep.subr.mxu0 %v118
    %246 = vmatpush1.xpose.msra.mxu0 %v117
    %247 = vmatprep.subr.mxu0 %v120
    %248 = vmatpush1.xpose.msra.mxu0 %v119
    %249 = vmatprep.subr.mxu0 %v122
    %250 = vmatpush1.xpose.msra.mxu0 %v121
    %251 = vmatprep.subr.mxu0 %v124
    %252 = vmatpush1.xpose.msra.mxu0 %v123
    %253 = vmatprep.subr.mxu0 %v126
    %254 = vmatpush1.xpose.msra.mxu0 %v125
    %255 = vmatprep.subr.mxu0 %v128
    %256 = vmatpush1.xpose.msra.mxu0 %v127
    %257 = vmatprep.subr.mxu0 %v130
    %258 = vmatpush1.xpose.msra.mxu0 %v129
    %259 = vmatprep.mubr.f32.mxu0 %v64
    %260 = vmatmul.mubr.f32.gmra.mrb[0].mxu0 %v63
    %v261 = vpop.f32.mrb[0].mxu0
    %v262 = vadd.f32 0.0, %v261
    %v263 = vpop.f32.mrb[0].mxu0
    %v264 = vadd.f32 0.0, %v263
    %265 = vmatprep.mubr.f32.mxu0 %v66
    %266 = vmatmul.mubr.f32.gmra.mrb[0].mxu0 %v65
    %v267 = vpop.f32.mrb[0].mxu0
    %v268 = vadd.f32 0.0, %v267
    %v269 = vpop.f32.mrb[0].mxu0
    %v270 = vadd.f32 0.0, %v269
    %271 = vdwg.mxu0
    %272 = vmatprep.subr.mxu0 %v132
    %273 = vmatpush1.xpose.msra.mxu0 %v131
    %274 = vmatprep.subr.mxu0 %v134
    %275 = vmatpush1.xpose.msra.mxu0 %v133
    %276 = vmatprep.subr.mxu0 %v136
    %277 = vmatpush1.xpose.msra.mxu0 %v135
    %278 = vmatprep.subr.mxu0 %v138
    %279 = vmatpush1.xpose.msra.mxu0 %v137
    %280 = vmatprep.subr.mxu0 %v140
    %281 = vmatpush1.xpose.msra.mxu0 %v139
    %282 = vmatprep.subr.mxu0 %v142
    %283 = vmatpush1.xpose.msra.mxu0 %v141
    %284 = vmatprep.subr.mxu0 %v144
    %285 = vmatpush1.xpose.msra.mxu0 %v143
    %286 = vmatprep.subr.mxu0 %v146
    %287 = vmatpush1.xpose.msra.mxu0 %v145
    %288 = vmatprep.subr.mxu0 %v148
    %289 = vmatpush1.xpose.msra.mxu0 %v147
    %290 = vmatprep.subr.mxu0 %v150
    %291 = vmatpush1.xpose.msra.mxu0 %v149
    %292 = vmatprep.subr.mxu0 %v152
    %293 = vmatpush1.xpose.msra.mxu0 %v151
    %294 = vmatprep.subr.mxu0 %v154
    %295 = vmatpush1.xpose.msra.mxu0 %v153
    %296 = vmatprep.subr.mxu0 %v156
    %297 = vmatpush1.xpose.msra.mxu0 %v155
    %298 = vmatprep.subr.mxu0 %v158
    %299 = vmatpush1.xpose.msra.mxu0 %v157
    %300 = vmatprep.subr.mxu0 %v160
    %301 = vmatpush1.xpose.msra.mxu0 %v159
    %302 = vmatprep.subr.mxu0 %v162
    %303 = vmatpush1.xpose.msra.mxu0 %v161
    %304 = vmatprep.subr.mxu0 %v164
    %305 = vmatpush1.xpose.msra.mxu0 %v163
    %306 = vmatprep.subr.mxu0 %v166
    %307 = vmatpush1.xpose.msra.mxu0 %v165
    %308 = vmatprep.subr.mxu0 %v168
    %309 = vmatpush1.xpose.msra.mxu0 %v167
    %310 = vmatprep.subr.mxu0 %v170
    %311 = vmatpush1.xpose.msra.mxu0 %v169
    %312 = vmatprep.subr.mxu0 %v172
    %313 = vmatpush1.xpose.msra.mxu0 %v171
    %314 = vmatprep.subr.mxu0 %v174
    %315 = vmatpush1.xpose.msra.mxu0 %v173
    %316 = vmatprep.subr.mxu0 %v176
    %317 = vmatpush1.xpose.msra.mxu0 %v175
    %318 = vmatprep.subr.mxu0 %v178
    %319 = vmatpush1.xpose.msra.mxu0 %v177
    %320 = vmatprep.subr.mxu0 %v180
    %321 = vmatpush1.xpose.msra.mxu0 %v179
    %322 = vmatprep.subr.mxu0 %v182
    %323 = vmatpush1.xpose.msra.mxu0 %v181
    %324 = vmatprep.subr.mxu0 %v184
    %325 = vmatpush1.xpose.msra.mxu0 %v183
    %326 = vmatprep.subr.mxu0 %v186
    %327 = vmatpush1.xpose.msra.mxu0 %v185
    %328 = vmatprep.subr.mxu0 %v188
    %329 = vmatpush1.xpose.msra.mxu0 %v187
    %330 = vmatprep.subr.mxu0 %v190
    %331 = vmatpush1.xpose.msra.mxu0 %v189
    %332 = vmatprep.subr.mxu0 %v192
    %333 = vmatpush1.xpose.msra.mxu0 %v191
    %334 = vmatprep.subr.mxu0 %v194
    %335 = vmatpush1.xpose.msra.mxu0 %v193
    %336 = vmatprep.mubr.f32.mxu0 %v64
    %337 = vmatmul.mubr.f32.gmra.mrb[0].mxu0 %v63
    %v338 = vpop.f32.mrb[0].mxu0
    %v339 = vadd.f32 0.0, %v338
    %v340 = vpop.f32.mrb[0].mxu0
    %v341 = vadd.f32 0.0, %v340
    %342 = vmatprep.mubr.f32.mxu0 %v66
    %343 = vmatmul.mubr.f32.gmra.mrb[0].mxu0 %v65
    %v344 = vpop.f32.mrb[0].mxu0
    %v345 = vadd.f32 0.0, %v344
    %v346 = vpop.f32.mrb[0].mxu0
    %v347 = vadd.f32 0.0, %v346
    %348 = vdwg.mxu0
    %v349 = vadd.f32 %v55, %v262
    %v350 = vadd.f32 %v56, %v264
    %v351 = vadd.f32 %v57, %v339
    %v352 = vadd.f32 %v58, %v341
    %v353 = vadd.f32 %v59, %v268
    %v354 = vadd.f32 %v60, %v270
    %v355 = vadd.f32 %v61, %v345
    %v356 = vadd.f32 %v62, %v347
    %357 = vst [vmem:[#allocation7] sm:$0xff] %v349
    %358 = vst [vmem:[#allocation7 + $0x8] sm:$0xff] %v350
    %359 = vst [vmem:[#allocation7 + $0x10] sm:$0xff] %v351
    %360 = vst [vmem:[#allocation7 + $0x18] sm:$0xff] %v352
    %361 = vst [vmem:[#allocation7 + $0x20] sm:$0xff] %v353
    %362 = vst [vmem:[#allocation7 + $0x28] sm:$0xff] %v354
    %363 = vst [vmem:[#allocation7 + $0x30] sm:$0xff] %v355
    %364 = vst [vmem:[#allocation7 + $0x38] sm:$0xff] %v356
    // Predicated region
    $region26: #{tpu_custom_call.1} parent=1 // pred_check
      %p365 = pneg %p43
    $region27: #{tpu_custom_call.1} parent=1 // pred_check_branch
      %367 = sbr.rel (%p365) target = $region29
    $region28: #{tpu_custom_call.1} parent=1 // pred_region
      %v368 = vld [vmem:[#allocation7] sm:$0xff]
      %v369 = vld [vmem:[#allocation7 + $0x8] sm:$0xff]
      %v370 = vld [vmem:[#allocation7 + $0x10] sm:$0xff]
      %v371 = vld [vmem:[#allocation7 + $0x18] sm:$0xff]
      %v372 = vld [vmem:[#allocation7 + $0x20] sm:$0xff]
      %v373 = vld [vmem:[#allocation7 + $0x28] sm:$0xff]
      %v374 = vld [vmem:[#allocation7 + $0x30] sm:$0xff]
      %v375 = vld [vmem:[#allocation7 + $0x38] sm:$0xff]
      %v376 = vld [vmem:[%s2] sm:$0xf]
      %v378 = vlaneseq
      %v379 = vshrl.u32 %v378, 7
      %v380 = vsub.s32 0, %v379
      %v381 = vrot.slane %v376, %v380
      %v382 = vlaneseq
      %v383 = vshrl.u32 %v382, 7
      %v384 = vsub.s32 1, %v383
      %v385 = vrot.slane %v376, %v384
      %v386 = vlaneseq
      %v387 = vshrl.u32 %v386, 7
      %v388 = vsub.s32 2, %v387
      %v389 = vrot.slane %v376, %v388
      %v390 = vlaneseq
      %v391 = vshrl.u32 %v390, 7
      %v392 = vsub.s32 3, %v391
      %v393 = vrot.slane %v376, %v392
      %v398 = vadd.f32 %v368, %v381
      %v399 = vadd.f32 %v369, %v385
      %v400 = vadd.f32 %v370, %v389
      %v401 = vadd.f32 %v371, %v393
      %v402 = vadd.f32 %v372, %v381
      %v403 = vadd.f32 %v373, %v385
      %v404 = vadd.f32 %v374, %v389
      %v405 = vadd.f32 %v375, %v393
      %406 = vst [vmem:[#allocation7] sm:$0xff] %v398
      %407 = vst [vmem:[#allocation7 + $0x8] sm:$0xff] %v399
      %408 = vst [vmem:[#allocation7 + $0x10] sm:$0xff] %v400
      %409 = vst [vmem:[#allocation7 + $0x18] sm:$0xff] %v401
      %410 = vst [vmem:[#allocation7 + $0x20] sm:$0xff] %v402
      %411 = vst [vmem:[#allocation7 + $0x28] sm:$0xff] %v403
      %412 = vst [vmem:[#allocation7 + $0x30] sm:$0xff] %v404
      %413 = vst [vmem:[#allocation7 + $0x38] sm:$0xff] %v405
    $region29: #{tpu_custom_call.1} parent=1 // pred_fallthru
      _
    // Predicated region
    $region30: #{tpu_custom_call.1} parent=1 // pred_check
      _
    $region31: #{tpu_custom_call.1} parent=1 // pred_check_branch
      %415 = sbr.rel (0) target = $region33
    $region32: #{tpu_custom_call.1} parent=1 // pred_region
      %s417 = ssub.s32 1024, 1024
      %418 = vsyncadd [#allocation4], %s417
      %s419 = sshll.u32 [#allocation7], 4
      %s420 = int_to_ptr.vmem [resolvable:$true] %s419
      %425 = dma.vmem_to_hbm [thread:$0]  %s420, 1024, %s3, [#allocation4], 512, 512, 32
    $region33: #{tpu_custom_call.1} parent=1 // pred_fallthru
      _
    // Predicated region
    $region34: #{tpu_custom_call.1} parent=1 // pred_check
      _
    $region35: #{tpu_custom_call.1} parent=1 // pred_check_branch
      %427 = sbr.rel (0) target = $region37
    $region36: #{tpu_custom_call.1} parent=1 // pred_region
      %428 = dma.done [#allocation4], 1024
    $region37: #{tpu_custom_call.1} parent=1 // pred_fallthru
      _
    %429 = vsyncpa [#allocation3], 1
    %430 = vsyncpa [#allocation6], 1
    %431 = vsyncpa [#allocation4], 1

</llo_original>
